<compile_context>
chip_gen: v7x
topology: tpu7x:2x2x1
jax: 0.10.0
libtpu: 0.0.40
codegen_flags: <defaults>
</compile_context>

<pallas_src>
import math
from functools import partial

import jax
import jax.numpy as jnp
from jax import lax
from jax.experimental import pallas as pl
from jax.experimental.pallas import tpu as pltpu


# ----------------------------------------------------------------------------
# Fast path: table resident in VMEM, gather = one-hot matmul on the MXU.
# ----------------------------------------------------------------------------
def _embed_vmem_kernel(ids_ref, emb_ref, o_ref, *, scale):
    ids = ids_ref[...]                                  # (1, T) int32
    vocab = emb_ref.shape[0]
    tile = ids.shape[1]
    # one_hot[v, t] = (ids[t] == v); avoids any lane<->sublane relayout of ids.
    iota_v = lax.broadcasted_iota(jnp.int32, (vocab, tile), 0)
    one_hot = (iota_v == ids).astype(emb_ref.dtype)     # (V, T)
    # (V,T)^T @ (V,D) -> (T,D); exact gather (one 1.0 per column).
    gathered = lax.dot_general(
        one_hot, emb_ref[...],
        dimension_numbers=(((0,), (0,)), ((), ())),
        preferred_element_type=jnp.float32)
    o_ref[...] = (gathered * scale).astype(o_ref.dtype)


# ----------------------------------------------------------------------------
# HBM path: per-row async DMAs, double-buffered across grid steps.
# ----------------------------------------------------------------------------
def _embed_hbm_kernel(ids_ref, emb_hbm, o_ref, buf, sems, *, tokens_per_tile, scale):
    T = tokens_per_tile
    i = pl.program_id(0)
    nsteps = pl.num_programs(0)
    slot = i & 1                                        # current gather buffer
    nslot = 1 - slot

    # Cache this tile's token ids NOW (trace-time list) so no SMEM reads are
    # serialized behind the DMA waits below.
    base = i * T
    toks = [ids_ref[base + t] for t in range(T)]

    def row_copy(tok, s, t):
        return pltpu.make_async_copy(
            emb_hbm.at[pl.ds(tok, 1)],                  # (1, d_model) HBM row
            buf.at[s, pl.ds(t, 1)],                     # (1, d_model) VMEM slot row
            sems.at[s, t])

    # Step 0: prime the pipeline with this tile's rows.
    @pl.when(i == 0)
    def _():
        for t in range(T):
            row_copy(toks[t], slot, t).start()

    # Prefetch next tile's rows into the other slot (ids already in SMEM),
    # issued BEFORE any wait so the HBM gather overlaps compute + writeback.
    @pl.when(i + 1 < nsteps)
    def _():
        nbase = (i + 1) * T
        for t in range(T):
            row_copy(ids_ref[nbase + t], nslot, t).start()

    # Wait on the current slot (descriptors rebuilt from the cached ids).
    for t in range(T):
        row_copy(toks[t], slot, t).wait()

    # Scale in the table's native dtype; lane-dense (T, d_model) store.
    o_ref[...] = (buf[slot] * scale).astype(o_ref.dtype)


# ----------------------------------------------------------------------------
# Wrapper
# ----------------------------------------------------------------------------
def input_embeddings(ids, emb_table, *, tokens_per_tile=None,
                     vmem_table_limit_bytes=4 << 20):
    """Pallas equivalent of InputEmbeddings.forward: embedding(ids) * sqrt(d_model)."""
    orig_shape = ids.shape
    vocab_size, d_model = emb_table.shape
    scale = math.sqrt(d_model)
    itemsize = jnp.dtype(emb_table.dtype).itemsize

    # Clamp untrusted ids (out-of-range ids would otherwise become OOB HBM DMAs).
    flat = jnp.clip(ids.reshape(-1).astype(jnp.int32), 0, vocab_size - 1)
    n = flat.shape[0]

    table_bytes = vocab_size * d_model * itemsize
    use_vmem_table = table_bytes <= vmem_table_limit_bytes

    # Sublane packing for the table dtype: f32 -> 8, bf16 -> 16, int8/fp8 -> 32.
    sublane = max(8, 32 // itemsize)
    unit = 128 if use_vmem_table else sublane           # lane-dense ids block on fast path
    if tokens_per_tile is None:
        tokens_per_tile = 256 if use_vmem_table else 128
    T = max(unit, ((int(tokens_per_tile) + unit - 1) // unit) * unit)
    T = min(T, ((n + unit - 1) // unit) * unit)         # don't over-allocate for tiny inputs

    num_tiles = -(-n // T)
    n_pad = num_tiles * T
    if n_pad != n:
        flat = jnp.pad(flat, (0, n_pad - n))            # pad with id 0 (valid, clamped)

    out_block_bytes = T * d_model * itemsize
    if use_vmem_table:
        need = table_bytes + 2 * out_block_bytes + 2 * T * 4 + (1 << 20)
    else:
        need = 2 * T * d_model * itemsize + 2 * out_block_bytes + (1 << 20)
    vmem_limit = int(min(max(2 * need, 16 << 20), 64 << 20))

    out_shape = jax.ShapeDtypeStruct((n_pad, d_model), emb_table.dtype)

    if use_vmem_table:
        ids2d = flat.reshape(num_tiles, T)
        cost = pl.CostEstimate(
            flops=2 * n_pad * vocab_size * d_model + n_pad * d_model,
            transcendentals=0,
            bytes_accessed=2 * n_pad * d_model * itemsize + table_bytes + 4 * n_pad)
        out = pl.pallas_call(
            partial(_embed_vmem_kernel, scale=scale),
            out_shape=out_shape,
            grid=(num_tiles,),
            in_specs=[
                pl.BlockSpec((1, T), lambda i: (i, 0)),                    # ids tile
                pl.BlockSpec((vocab_size, d_model), lambda i: (0, 0)),     # whole table, VMEM-resident
            ],
            out_specs=pl.BlockSpec((T, d_model), lambda i: (i, 0)),
            compiler_params=pltpu.CompilerParams(
                dimension_semantics=("parallel",),       # independent tiles -> v7x megacore
                vmem_limit_bytes=vmem_limit,
            ),
            cost_estimate=cost,
        )(ids2d, emb_table)
    else:
        cost = pl.CostEstimate(
            flops=n_pad * d_model,
            transcendentals=0,
            bytes_accessed=2 * n_pad * d_model * itemsize + 4 * n_pad)
        out = pl.pallas_call(
            partial(_embed_hbm_kernel, tokens_per_tile=T, scale=scale),
            out_shape=out_shape,
            grid_spec=pltpu.PrefetchScalarGridSpec(
                num_scalar_prefetch=1,                                     # token ids -> SMEM
                grid=(num_tiles,),
                in_specs=[pl.BlockSpec(memory_space=pl.ANY)],              # table stays in HBM
                out_specs=pl.BlockSpec((T, d_model), lambda i, ids: (i, 0)),
                scratch_shapes=[
                    pltpu.VMEM((2, T, d_model), emb_table.dtype),          # double-buffered gather
                    pltpu.SemaphoreType.DMA((2, T)),                       # one sem per in-flight row
                ],
            ),
            compiler_params=pltpu.CompilerParams(
                # Cross-step DMA pipeline state (prefetch at i, wait at i+1)
                # requires in-order traversal on a single core.
                dimension_semantics=("arbitrary",),
                vmem_limit_bytes=vmem_limit,
            ),
            cost_estimate=cost,
        )(flat, emb_table)

    return out[:n].reshape(*orig_shape, d_model)


if __name__ == "__main__":
    key = jax.random.PRNGKey(0)
    k_ids, k_emb = jax.random.split(key)

    batch, seq = 2, 8
    vocab_size, d_model = 32, 128   # d_model multiple of 128 -> lane-dense output

    ids = jax.random.randint(k_ids, (batch, seq), 0, vocab_size, dtype=jnp.int32)
    emb_table = jax.random.normal(k_emb, (vocab_size, d_model), dtype=jnp.float32)

    # Pure-JAX reference: embedding lookup scaled by sqrt(d_model).
    ref = emb_table[ids] * jnp.float32(math.sqrt(d_model))

    # Fast path: 16 KiB table -> VMEM-resident, one-hot MXU gather.
    out = jax.block_until_ready(input_embeddings(ids, emb_table))
    assert out.shape == (batch, seq, d_model)
    assert out.dtype == emb_table.dtype
    assert jnp.allclose(out, ref, atol=1e-6, rtol=1e-6)

    # HBM path (forced): double-buffered per-row DMA gather, 2 grid steps.
    out_hbm = jax.block_until_ready(
        input_embeddings(ids, emb_table, tokens_per_tile=8, vmem_table_limit_bytes=0))
    assert jnp.allclose(out_hbm, ref, atol=1e-6, rtol=1e-6)

    print("KERNEL_OK")
</pallas_src>

<mosaic_0001>
module attributes {stable_mosaic.version = 11 : i64} {
  func.func @_embed_vmem_kernel(%arg0: i32, %arg1: memref<1x128xi32, #tpu.memory_space<vmem>>, %arg2: memref<32x128xf32, #tpu.memory_space<vmem>>, %arg3: memref<128x128xf32, #tpu.memory_space<vmem>>) attributes {dimension_semantics = [#tpu.dimension_semantics<parallel>], iteration_bounds = array<i64: 1>, scalar_prefetch = 0 : i64, scratch_operands = 0 : i64, tpu.core_type = #tpu.core_type<tc>, window_params = [{transform_indices = @transform_0, window_bounds = array<i64: 1, 128>}, {pipeline_mode = #tpu.pipeline_mode<synchronous>, transform_indices = @transform_1, window_bounds = array<i64: 32, 128>}, {transform_indices = @transform_2, window_bounds = array<i64: 128, 128>}]} {
    %c0 = arith.constant 0 : index
    %c0_0 = arith.constant 0 : index
    %0 = vector.load %arg1[%c0, %c0_0] : memref<1x128xi32, #tpu.memory_space<vmem>>, vector<1x128xi32>
    %1 = tpu.iota {dimensions = array<i32: 0>} : vector<32x128xi32>
    %2 = vector.broadcast %0 : vector<1x128xi32> to vector<32x128xi32>
    %3 = arith.cmpi eq, %1, %2 : vector<32x128xi32>
    %4 = arith.extui %3 : vector<32x128xi1> to vector<32x128xi32>
    %5 = arith.sitofp %4 : vector<32x128xi32> to vector<32x128xf32>
    %c0_1 = arith.constant 0 : index
    %c0_2 = arith.constant 0 : index
    %6 = vector.load %arg2[%c0_1, %c0_2] : memref<32x128xf32, #tpu.memory_space<vmem>>, vector<32x128xf32>
    %cst = arith.constant dense<0.000000e+00> : vector<128x128xf32>
    %7 = tpu.matmul %5, %6, %cst {dimension_numbers = #tpu.dot_dimension_numbers<[0], [0], [1], [1], [0, 1, 1, 1], [], []>} : vector<32x128xf32>, vector<32x128xf32>, vector<128x128xf32> -> vector<128x128xf32>
    %cst_3 = arith.constant 11.3137083 : f32
    %8 = vector.broadcast %cst_3 : f32 to vector<128x128xf32>
    %9 = arith.mulf %7, %8 : vector<128x128xf32>
    %c0_4 = arith.constant 0 : index
    %c0_5 = arith.constant 0 : index
    %10 = vector.load %arg3[%c0_4, %c0_5] : memref<128x128xf32, #tpu.memory_space<vmem>>, vector<128x128xf32>
    tpu.vector_store %arg3[%c0_4, %c0_5], %9 {strides = array<i32>} : memref<128x128xf32, #tpu.memory_space<vmem>>, vector<128x128xf32>,
    return
  }
  func.func @transform_0(%arg0: i32) -> (i32, i32) {
    %c0_i32 = arith.constant 0 : i32
    %c0_i32_0 = arith.constant 0 : i32
    return %arg0, %c0_i32 : i32, i32
  }
  func.func @transform_1(%arg0: i32) -> (i32, i32) {
    %c0_i32 = arith.constant 0 : i32
    %c0_i32_0 = arith.constant 0 : i32
    %c0_i32_1 = arith.constant 0 : i32
    return %c0_i32, %c0_i32_0 : i32, i32
  }
  func.func @transform_2(%arg0: i32) -> (i32, i32) {
    %c0_i32 = arith.constant 0 : i32
    %c0_i32_0 = arith.constant 0 : i32
    return %arg0, %c0_i32 : i32, i32
  }
}

</mosaic_0001>

<llo_original>
// kernel: tpu_custom_call.1
$region0: #{tpu_custom_call.1}
  #allocation0 [shape = 'u32[]', space=smem, size = 0x4, offset = 0x4, fixed_abs, tag = 'smem constant byte address 0x4 - core index']
  #allocation1 [shape = 'u32[144,128]{1,0:T(1,128)}', space=vmem, size = 0x12000, scoped, tag = 'internal scratch']
  %s0 = inlined_call_operand.hbm [shape: s32[1,128], index: 0, kind: input, shape index: {}]
  %s1 = inlined_call_operand.hbm [shape: f32[32,128], index: 1, kind: input, shape index: {}]
  %s2 = inlined_call_operand.hbm [shape: f32[128,128], index: 2, kind: output, shape index: {}]
  %s3 = sld [smem:[#allocation0]]
  $region26: #{tpu_custom_call.1} parent=0
    _
  %s5 = ssub.s32 1, %s3
  %s6 = scalar_select 0, %s5, %s3
  $region1: #{tpu_custom_call.1} parent=0
    #allocation2 [shape = 'u8[512]{0}', space=vmem, size = 0x400, scoped, tag = 'input window, operand 0, single buffered']
    #allocation3 [shape = 's32[1]{0}', space=sflag, size = 0x4, scoped, tag = 'scoped memory for tpu_custom_call.1']
    #allocation4 [shape = 's32[1]{0}', space=sflag, size = 0x4, scoped, tag = 'scoped memory for tpu_custom_call.1']
    #allocation5 [shape = 'u8[16384]{0}', space=vmem, size = 0x4000, scoped, tag = 'input window, operand 1, single buffered']
    #allocation6 [shape = 's32[1]{0}', space=sflag, size = 0x4, scoped, tag = 'scoped memory for tpu_custom_call.1']
    #allocation7 [shape = 'u8[65536]{0}', space=vmem, size = 0x10000, scoped, tag = 'output window, operand 0, single buffered']
    %7 = vsyncpa [#allocation3], 0
    %8 = vsyncpa [#allocation6], 0
    %9 = vsyncpa [#allocation4], 0
    // Predicated region
    $region2: #{tpu_custom_call.1} parent=1 // pred_check
      _
    $region3: #{tpu_custom_call.1} parent=1 // pred_check_branch
      %11 = sbr.rel (0) target = $region5
    $region4: #{tpu_custom_call.1} parent=1 // pred_region
      %s13 = ssub.s32 16, 16
      %14 = vsyncadd [#allocation3], %s13
      %s16 = sshll.u32 [#allocation2], 4
      %s17 = int_to_ptr.vmem [resolvable:$true] %s16
      %19 = dma.hbm_to_vmem [thread:$0]  %s0, 16, %s17, [#allocation3]
    $region5: #{tpu_custom_call.1} parent=1 // pred_fallthru
      _
    // Predicated region
    $region6: #{tpu_custom_call.1} parent=1 // pred_check
      _
    $region7: #{tpu_custom_call.1} parent=1 // pred_check_branch
      %21 = sbr.rel (0) target = $region9
    $region8: #{tpu_custom_call.1} parent=1 // pred_region
      %s23 = ssub.s32 512, 512
      %24 = vsyncadd [#allocation6], %s23
      %s25 = sshll.u32 [#allocation5], 4
      %s26 = int_to_ptr.vmem [resolvable:$true] %s25
      %31 = dma.hbm_to_vmem [thread:$0]  %s1, 512, %s26, [#allocation6], 128, 128, 8
    $region9: #{tpu_custom_call.1} parent=1 // pred_fallthru
      _
    // Predicated region
    $region10: #{tpu_custom_call.1} parent=1 // pred_check
      _
    $region11: #{tpu_custom_call.1} parent=1 // pred_check_branch
      %33 = sbr.rel (0) target = $region13
    $region12: #{tpu_custom_call.1} parent=1 // pred_region
      %34 = dma.done [#allocation3], 16
    $region13: #{tpu_custom_call.1} parent=1 // pred_fallthru
      _
    // Predicated region
    $region14: #{tpu_custom_call.1} parent=1 // pred_check
      _
    $region15: #{tpu_custom_call.1} parent=1 // pred_check_branch
      %36 = sbr.rel (0) target = $region17
    $region16: #{tpu_custom_call.1} parent=1 // pred_region
      %37 = dma.done [#allocation6], 512
    $region17: #{tpu_custom_call.1} parent=1 // pred_fallthru
      _
    %v38 = vld [vmem:[#allocation2] sm:$0x1]
    %v39 = vlaneseq
    %v40 = vshrl.u32 %v39, 7
    %v41 = vadd.s32 %v40, 8
    %v42 = vadd.s32 %v40, 16
    %v43 = vadd.s32 %v40, 24
    %v44 = vlaneseq
    %v45 = vshrl.u32 %v44, 7
    %v46 = vsub.s32 0, %v45
    %v47 = vrot.slane %v38, %v46
    %vm48 = vcmp.eq.s32.totalorder %v40, %v47
    %vm49 = vcmp.eq.s32.totalorder %v41, %v47
    %vm50 = vcmp.eq.s32.totalorder %v42, %v47
    %vm51 = vcmp.eq.s32.totalorder %v43, %v47
    %v52 = vsel %vm48, 1, 0
    %v53 = vsel %vm49, 1, 0
    %v54 = vsel %vm50, 1, 0
    %v55 = vsel %vm51, 1, 0
    %v56 = vcvt.s32.f32 %v52
    %v57 = vcvt.s32.f32 %v53
    %v58 = vcvt.s32.f32 %v54
    %v59 = vcvt.s32.f32 %v55
    %v60 = vld [vmem:[#allocation5] sm:$0xff]
    %v61 = vld [vmem:[#allocation5 + $0x8] sm:$0xff]
    %v62 = vld [vmem:[#allocation5 + $0x10] sm:$0xff]
    %v63 = vld [vmem:[#allocation5 + $0x18] sm:$0xff]
    %64 = vxpose.xlu0.b32.start [1/16] %v56, 128
    %65 = vxpose.xlu0.b32.cont [2/16] %v57, 128
    %66 = vxpose.xlu0.b32.cont [3/16] %v58, 128
    %67 = vxpose.xlu0.b32.cont [4/16] %v59, 128
    %68 = vxpose.xlu0.b32.cont [5/16] 0.0, 128
    %69 = vxpose.xlu0.b32.cont [6/16] 0.0, 128
    %70 = vxpose.xlu0.b32.cont [7/16] 0.0, 128
    %71 = vxpose.xlu0.b32.cont [8/16] 0.0, 128
    %72 = vxpose.xlu0.b32.cont [9/16] 0.0, 128
    %73 = vxpose.xlu0.b32.cont [10/16] 0.0, 128
    %74 = vxpose.xlu0.b32.cont [11/16] 0.0, 128
    %75 = vxpose.xlu0.b32.cont [12/16] 0.0, 128
    %76 = vxpose.xlu0.b32.cont [13/16] 0.0, 128
    %77 = vxpose.xlu0.b32.cont [14/16] 0.0, 128
    %78 = vxpose.xlu0.b32.cont [15/16] 0.0, 128
    %79 = vxpose.xlu0.b32.end [16/16] 0.0, 128
    %v80 = vpop.trf.xlu0
    %v81 = vpop.trf.xlu0
    %v82 = vpop.trf.xlu0
    %v83 = vpop.trf.xlu0
    %v84 = vpop.trf.xlu0
    %v85 = vpop.trf.xlu0
    %v86 = vpop.trf.xlu0
    %v87 = vpop.trf.xlu0
    %v88 = vpop.trf.xlu0
    %v89 = vpop.trf.xlu0
    %v90 = vpop.trf.xlu0
    %v91 = vpop.trf.xlu0
    %v92 = vpop.trf.xlu0
    %v93 = vpop.trf.xlu0
    %v94 = vpop.trf.xlu0
    %v95 = vpop.trf.xlu0
    %vm96 = vcmask 261120
    %v98 = vsel %vm96, %v80, 0
    %v101 = vsel %vm96, %v81, 0
    %v104 = vsel %vm96, %v82, 0
    %v107 = vsel %vm96, %v83, 0
    %v110 = vsel %vm96, %v84, 0
    %v113 = vsel %vm96, %v85, 0
    %v116 = vsel %vm96, %v86, 0
    %v119 = vsel %vm96, %v87, 0
    %v122 = vsel %vm96, %v88, 0
    %v125 = vsel %vm96, %v89, 0
    %v128 = vsel %vm96, %v90, 0
    %v131 = vsel %vm96, %v91, 0
    %v134 = vsel %vm96, %v92, 0
    %v137 = vsel %vm96, %v93, 0
    %v140 = vsel %vm96, %v94, 0
    %v143 = vsel %vm96, %v95, 0
    %145 = vmatprep.subr.mxu0 0.0
    %146 = vmatpush1.msra.mxu0 %v60
    %147 = vmatprep.subr.mxu0 0.0
    %148 = vmatpush1.msra.mxu0 %v61
    %149 = vmatprep.subr.mxu0 0.0
    %150 = vmatpush1.msra.mxu0 %v62
    %151 = vmatprep.subr.mxu0 0.0
    %152 = vmatpush1.msra.mxu0 %v63
    %153 = vmatprep.subr.mxu0 0.0
    %154 = vmatpush1.msra.mxu0 0.0
    %155 = vmatprep.subr.mxu0 0.0
    %156 = vmatpush1.msra.mxu0 0.0
    %157 = vmatprep.subr.mxu0 0.0
    %158 = vmatpush1.msra.mxu0 0.0
    %159 = vmatprep.subr.mxu0 0.0
    %160 = vmatpush1.msra.mxu0 0.0
    %161 = vmatprep.subr.mxu0 0.0
    %162 = vmatpush1.msra.mxu0 0.0
    %163 = vmatprep.subr.mxu0 0.0
    %164 = vmatpush1.msra.mxu0 0.0
    %165 = vmatprep.subr.mxu0 0.0
    %166 = vmatpush1.msra.mxu0 0.0
    %167 = vmatprep.subr.mxu0 0.0
    %168 = vmatpush1.msra.mxu0 0.0
    %169 = vmatprep.subr.mxu0 0.0
    %170 = vmatpush1.msra.mxu0 0.0
    %171 = vmatprep.subr.mxu0 0.0
    %172 = vmatpush1.msra.mxu0 0.0
    %173 = vmatprep.subr.mxu0 0.0
    %174 = vmatpush1.msra.mxu0 0.0
    %175 = vmatprep.subr.mxu0 0.0
    %176 = vmatpush1.msra.mxu0 0.0
    %177 = vmatprep.subr.mxu0 0.0
    %178 = vmatpush1.msra.mxu0 0.0
    %179 = vmatprep.subr.mxu0 0.0
    %180 = vmatpush1.msra.mxu0 0.0
    %181 = vmatprep.subr.mxu0 0.0
    %182 = vmatpush1.msra.mxu0 0.0
    %183 = vmatprep.subr.mxu0 0.0
    %184 = vmatpush1.msra.mxu0 0.0
    %185 = vmatprep.subr.mxu0 0.0
    %186 = vmatpush1.msra.mxu0 0.0
    %187 = vmatprep.subr.mxu0 0.0
    %188 = vmatpush1.msra.mxu0 0.0
    %189 = vmatprep.subr.mxu0 0.0
    %190 = vmatpush1.msra.mxu0 0.0
    %191 = vmatprep.subr.mxu0 0.0
    %192 = vmatpush1.msra.mxu0 0.0
    %193 = vmatprep.subr.mxu0 0.0
    %194 = vmatpush1.msra.mxu0 0.0
    %195 = vmatprep.subr.mxu0 0.0
    %196 = vmatpush1.msra.mxu0 0.0
    %197 = vmatprep.subr.mxu0 0.0
    %198 = vmatpush1.msra.mxu0 0.0
    %199 = vmatprep.subr.mxu0 0.0
    %200 = vmatpush1.msra.mxu0 0.0
    %201 = vmatprep.subr.mxu0 0.0
    %202 = vmatpush1.msra.mxu0 0.0
    %203 = vmatprep.subr.mxu0 0.0
    %204 = vmatpush1.msra.mxu0 0.0
    %205 = vmatprep.subr.mxu0 0.0
    %206 = vmatpush1.msra.mxu0 0.0
    %207 = vmatprep.subr.mxu0 0.0
    %208 = vmatpush1.msra.mxu0 0.0
    %209 = vmatprep.mubr.f32.mxu0 0.0
    %210 = vmatmul.mubr.f32.gmra.mrb[0].mxu0 %v98
    %v211 = vpop.f32.mrb[0].mxu0
    %v212 = vadd.f32 0.0, %v211
    %v213 = vpop.f32.mrb[0].mxu0
    %214 = vmatprep.mubr.f32.mxu0 0.0
    %215 = vmatmul.mubr.f32.gmra.mrb[0].mxu0 %v101
    %v216 = vpop.f32.mrb[0].mxu0
    %v217 = vadd.f32 0.0, %v216
    %v218 = vpop.f32.mrb[0].mxu0
    %219 = vmatprep.mubr.f32.mxu0 0.0
    %220 = vmatmul.mubr.f32.gmra.mrb[0].mxu0 %v104
    %v221 = vpop.f32.mrb[0].mxu0
    %v222 = vadd.f32 0.0, %v221
    %v223 = vpop.f32.mrb[0].mxu0
    %224 = vmatprep.mubr.f32.mxu0 0.0
    %225 = vmatmul.mubr.f32.gmra.mrb[0].mxu0 %v107
    %v226 = vpop.f32.mrb[0].mxu0
    %v227 = vadd.f32 0.0, %v226
    %v228 = vpop.f32.mrb[0].mxu0
    %229 = vmatprep.mubr.f32.mxu0 0.0
    %230 = vmatmul.mubr.f32.gmra.mrb[0].mxu0 %v110
    %v231 = vpop.f32.mrb[0].mxu0
    %v232 = vadd.f32 0.0, %v231
    %v233 = vpop.f32.mrb[0].mxu0
    %234 = vmatprep.mubr.f32.mxu0 0.0
    %235 = vmatmul.mubr.f32.gmra.mrb[0].mxu0 %v113
    %v236 = vpop.f32.mrb[0].mxu0
    %v237 = vadd.f32 0.0, %v236
    %v238 = vpop.f32.mrb[0].mxu0
    %239 = vmatprep.mubr.f32.mxu0 0.0
    %240 = vmatmul.mubr.f32.gmra.mrb[0].mxu0 %v116
    %v241 = vpop.f32.mrb[0].mxu0
    %v242 = vadd.f32 0.0, %v241
    %v243 = vpop.f32.mrb[0].mxu0
    %244 = vmatprep.mubr.f32.mxu0 0.0
    %245 = vmatmul.mubr.f32.gmra.mrb[0].mxu0 %v119
    %v246 = vpop.f32.mrb[0].mxu0
    %v247 = vadd.f32 0.0, %v246
    %v248 = vpop.f32.mrb[0].mxu0
    %249 = vmatprep.mubr.f32.mxu0 0.0
    %250 = vmatmul.mubr.f32.gmra.mrb[0].mxu0 %v122
    %v251 = vpop.f32.mrb[0].mxu0
    %v252 = vadd.f32 0.0, %v251
    %v253 = vpop.f32.mrb[0].mxu0
    %254 = vmatprep.mubr.f32.mxu0 0.0
    %255 = vmatmul.mubr.f32.gmra.mrb[0].mxu0 %v125
    %v256 = vpop.f32.mrb[0].mxu0
    %v257 = vadd.f32 0.0, %v256
    %v258 = vpop.f32.mrb[0].mxu0
    %259 = vmatprep.mubr.f32.mxu0 0.0
    %260 = vmatmul.mubr.f32.gmra.mrb[0].mxu0 %v128
    %v261 = vpop.f32.mrb[0].mxu0
    %v262 = vadd.f32 0.0, %v261
    %v263 = vpop.f32.mrb[0].mxu0
    %264 = vmatprep.mubr.f32.mxu0 0.0
    %265 = vmatmul.mubr.f32.gmra.mrb[0].mxu0 %v131
    %v266 = vpop.f32.mrb[0].mxu0
    %v267 = vadd.f32 0.0, %v266
    %v268 = vpop.f32.mrb[0].mxu0
    %269 = vmatprep.mubr.f32.mxu0 0.0
    %270 = vmatmul.mubr.f32.gmra.mrb[0].mxu0 %v134
    %v271 = vpop.f32.mrb[0].mxu0
    %v272 = vadd.f32 0.0, %v271
    %v273 = vpop.f32.mrb[0].mxu0
    %274 = vmatprep.mubr.f32.mxu0 0.0
    %275 = vmatmul.mubr.f32.gmra.mrb[0].mxu0 %v137
    %v276 = vpop.f32.mrb[0].mxu0
    %v277 = vadd.f32 0.0, %v276
    %v278 = vpop.f32.mrb[0].mxu0
    %279 = vmatprep.mubr.f32.mxu0 0.0
    %280 = vmatmul.mubr.f32.gmra.mrb[0].mxu0 %v140
    %v281 = vpop.f32.mrb[0].mxu0
    %v282 = vadd.f32 0.0, %v281
    %v283 = vpop.f32.mrb[0].mxu0
    %284 = vmatprep.mubr.f32.mxu0 0.0
    %285 = vmatmul.mubr.f32.gmra.mrb[0].mxu0 %v143
    %v286 = vpop.f32.mrb[0].mxu0
    %v287 = vadd.f32 0.0, %v286
    %v288 = vpop.f32.mrb[0].mxu0
    %289 = vdwg.mxu0
    %v290 = vmul.f32 %v212, 11.313708
    %v291 = vmul.f32 %v217, 11.313708
    %v292 = vmul.f32 %v222, 11.313708
    %v293 = vmul.f32 %v227, 11.313708
    %v294 = vmul.f32 %v232, 11.313708
    %v295 = vmul.f32 %v237, 11.313708
    %v296 = vmul.f32 %v242, 11.313708
    %v297 = vmul.f32 %v247, 11.313708
    %v298 = vmul.f32 %v252, 11.313708
    %v299 = vmul.f32 %v257, 11.313708
    %v300 = vmul.f32 %v262, 11.313708
    %v301 = vmul.f32 %v267, 11.313708
    %v302 = vmul.f32 %v272, 11.313708
    %v303 = vmul.f32 %v277, 11.313708
    %v304 = vmul.f32 %v282, 11.313708
    %v305 = vmul.f32 %v287, 11.313708
    %306 = vst [vmem:[#allocation7] sm:$0xff] %v290
    %307 = vst [vmem:[#allocation7 + $0x8] sm:$0xff] %v291
    %308 = vst [vmem:[#allocation7 + $0x10] sm:$0xff] %v292
    %309 = vst [vmem:[#allocation7 + $0x18] sm:$0xff] %v293
    %310 = vst [vmem:[#allocation7 + $0x20] sm:$0xff] %v294
    %311 = vst [vmem:[#allocation7 + $0x28] sm:$0xff] %v295
    %312 = vst [vmem:[#allocation7 + $0x30] sm:$0xff] %v296
    %313 = vst [vmem:[#allocation7 + $0x38] sm:$0xff] %v297
    %314 = vst [vmem:[#allocation7 + $0x40] sm:$0xff] %v298
    %315 = vst [vmem:[#allocation7 + $0x48] sm:$0xff] %v299
    %316 = vst [vmem:[#allocation7 + $0x50] sm:$0xff] %v300
    %317 = vst [vmem:[#allocation7 + $0x58] sm:$0xff] %v301
    %318 = vst [vmem:[#allocation7 + $0x60] sm:$0xff] %v302
    %319 = vst [vmem:[#allocation7 + $0x68] sm:$0xff] %v303
    %320 = vst [vmem:[#allocation7 + $0x70] sm:$0xff] %v304
    %321 = vst [vmem:[#allocation7 + $0x78] sm:$0xff] %v305
    // Predicated region
    $region18: #{tpu_custom_call.1} parent=1 // pred_check
      _
    $region19: #{tpu_custom_call.1} parent=1 // pred_check_branch
      %323 = sbr.rel (0) target = $region21
    $region20: #{tpu_custom_call.1} parent=1 // pred_region
      %s325 = ssub.s32 2048, 2048
      %326 = vsyncadd [#allocation4], %s325
      %s327 = sshll.u32 [#allocation7], 4
      %s328 = int_to_ptr.vmem [resolvable:$true] %s327
      %333 = dma.vmem_to_hbm [thread:$0]  %s328, 2048, %s2, [#allocation4], 128, 128, 8
    $region21: #{tpu_custom_call.1} parent=1 // pred_fallthru
      _
    // Predicated region
    $region22: #{tpu_custom_call.1} parent=1 // pred_check
      _
    $region23: #{tpu_custom_call.1} parent=1 // pred_check_branch
      %335 = sbr.rel (0) target = $region25
    $region24: #{tpu_custom_call.1} parent=1 // pred_region
      %336 = dma.done [#allocation4], 2048
    $region25: #{tpu_custom_call.1} parent=1 // pred_fallthru
      _
    %337 = vsyncpa [#allocation3], 1
    %338 = vsyncpa [#allocation6], 1
    %339 = vsyncpa [#allocation4], 1

</llo_original>
